<compile_context>
chip_gen: v5e
topology: v5e:2x2
jax: 0.10.0
libtpu: 0.0.40
codegen_flags: <defaults>
</compile_context>

<pallas_src>
import functools

import jax
import jax.numpy as jnp
from jax.experimental import pallas as pl
from jax.experimental.pallas import tpu as pltpu


# ----------------------------------------------------------------------------- helpers
def _round_up(x, m):
    return ((x + m - 1) // m) * m


def _cdiv(a, b):
    return -(-a // b)


def _vmem_capacity_bytes():
    """Physical per-core VMEM (64 MiB v7x, 128 MiB v5e/v6e); defensive fallback."""
    try:
        info = pltpu.get_tpu_info()
        for attr in ("vmem_capacity_bytes", "vmem_bytes", "vmem_size_bytes"):
            val = getattr(info, attr, None)
            if val:
                return int(val)
    except Exception:
        pass
    return 64 * 1024 * 1024  # smallest across generations -> always safe


def _pick_row_tile(n128, h_pad, c_pad, budget_bytes, tm_cap=2048):
    """Row tile TM and tile count g, budgeting each pallas_call separately.

    Residents are modelled double-buffered (worst case; they are tiny after the
    projection hoist).  Streamed blocks: A row tile (bf16, 2 buffers) + output
    row tile (2 buffers).
    """
    res1 = 2 * (n128 * h_pad * 2 + h_pad * c_pad * 2 + h_pad * 4)   # XW1, W2, b1
    res2 = 2 * (n128 * c_pad * 2 + c_pad * 4)                       # HW2, b2
    per_row1 = 2 * (n128 * 2) + 2 * (c_pad * 2)                     # A + HW2-out (bf16)
    per_row2 = 2 * (n128 * 2) + 2 * (c_pad * 4)                     # A + logits-out (f32)
    tm1 = max(budget_bytes - res1, 0) // per_row1
    tm2 = max(budget_bytes - res2, 0) // per_row2
    tm = int(min(tm1, tm2)) // 128 * 128
    tm = max(128, min(tm, tm_cap, n128))
    # Re-balance into g equal-ish 128-aligned tiles so row-pad waste is < 128*g.
    g = _cdiv(n128, tm)
    tm = _round_up(_cdiv(n128, g), 128)
    return tm, g


# ----------------------------------------------------------------------------- kernels
def _gcn_layer1_kernel(a_ref, xw1_ref, w2_ref, b1_ref, hw2_ref):
    """hw2 = relu(A_tile @ XW1 + b1) @ W2   (dropout in eval mode is identity)."""
    z = jnp.dot(a_ref[...], xw1_ref[...],
                preferred_element_type=jnp.float32)            # (TM, H_pad) f32
    h = jnp.maximum(z + b1_ref[...], 0.0)                      # bias + ReLU in f32
    hw2 = jnp.dot(h.astype(jnp.bfloat16), w2_ref[...],
                  preferred_element_type=jnp.float32)          # fused W2 projection
    hw2_ref[...] = hw2.astype(hw2_ref.dtype)                   # bf16, lane-dense store


def _gcn_layer2_kernel(a_ref, hw2_ref, b2_ref, o_ref, *, num_classes):
    """o = log_softmax(A_tile @ HW2 + b2) over the valid class columns."""
    z = jnp.dot(a_ref[...], hw2_ref[...],
                preferred_element_type=jnp.float32)            # (TM, C_pad) f32
    z = z + b2_ref[...]

    # Mask padded class columns so they do not perturb the softmax.
    col = jax.lax.broadcasted_iota(jnp.int32, z.shape, dimension=1)
    z = jnp.where(col < num_classes, z, -jnp.inf)

    # Numerically stable log_softmax over dim=1 (classes), f32.
    m = jnp.max(z, axis=1, keepdims=True)
    s = z - m
    lse = jnp.log(jnp.sum(jnp.exp(s), axis=1, keepdims=True))
    o_ref[...] = s - lse                                       # lane-dense f32 store


# ----------------------------------------------------------------------------- wrapper
def plan_tiling(n, h_dim, c):
    n128 = _round_up(n, 128)
    h_pad = _round_up(h_dim, 128)
    c_pad = _round_up(c, 128)
    budget = int(_vmem_capacity_bytes() * 0.55)   # per-call; headroom for megacore copy
    tm, g = _pick_row_tile(n128, h_pad, c_pad, budget)
    return dict(n128=n128, h_pad=h_pad, c_pad=c_pad, tm=tm, g=g, n_rows=tm * g)


def pad_gcn_inputs(a_hat, x, w1, b1, w2, b2):
    """Pad once (outside the hot path).  Zero padding is semantically inert:
    padded columns of A are zero, so garbage rows of intermediates never mix in.
    """
    n, f = x.shape
    h_dim = w1.shape[1]
    c = w2.shape[1]
    plan = plan_tiling(n, h_dim, c)
    n128, h_pad, c_pad, n_rows = plan["n128"], plan["h_pad"], plan["c_pad"], plan["n_rows"]
    f_pad = _round_up(f, 128)

    b1 = jnp.asarray(b1, jnp.float32).reshape(1, -1)
    b2 = jnp.asarray(b2, jnp.float32).reshape(1, -1)

    a_p = jnp.zeros((n_rows, n128), jnp.bfloat16).at[:n, :n].set(a_hat.astype(jnp.bfloat16))
    x_p = jnp.zeros((n128, f_pad), jnp.bfloat16).at[:n, :f].set(x.astype(jnp.bfloat16))
    w1_p = jnp.zeros((f_pad, h_pad), jnp.bfloat16).at[:f, :h_dim].set(w1.astype(jnp.bfloat16))
    b1_p = jnp.zeros((1, h_pad), jnp.float32).at[:, :h_dim].set(b1)
    w2_p = jnp.zeros((h_pad, c_pad), jnp.bfloat16).at[:h_dim, :c].set(w2.astype(jnp.bfloat16))
    b2_p = jnp.zeros((1, c_pad), jnp.float32).at[:, :c].set(b2)
    return (a_p, x_p, w1_p, b1_p, w2_p, b2_p), plan


@functools.partial(jax.jit, static_argnames=("num_classes", "tm"))
def gcn_forward_padded(a_p, x_p, w1_p, b1_p, w2_p, b2_p, *, num_classes, tm):
    n_rows, n128 = a_p.shape
    h_pad = w1_p.shape[1]
    c_pad = w2_p.shape[1]
    grid = (n_rows // tm,)

    vmem_cap = _vmem_capacity_bytes()
    cparams = pltpu.CompilerParams(
        dimension_semantics=("parallel",),                     # 2 TCs on v7x split rows
        vmem_limit_bytes=min(int(vmem_cap * 0.8), 100 * 1024 * 1024),
    )

    def row_tile(cols):
        return pl.BlockSpec((tm, cols), lambda i: (i, 0))

    def resident(shape):
        return pl.BlockSpec(shape, lambda i: (0, 0))

    # ---- hoisted dense projection: XW1 computed ONCE (plain XLA) -----------
    xw1 = jnp.dot(x_p, w1_p, preferred_element_type=jnp.float32).astype(jnp.bfloat16)

    # ---- layer 1 (+ fused W2 projection): HW2 = relu(A @ XW1 + b1) @ W2 ----
    hw2 = pl.pallas_call(
        _gcn_layer1_kernel,
        grid=grid,
        in_specs=[row_tile(n128),                    # A row tile, streamed
                  resident((n128, h_pad)),           # XW1 (small, resident)
                  resident((h_pad, c_pad)),          # W2
                  resident((1, h_pad))],             # b1
        out_specs=row_tile(c_pad),
        out_shape=jax.ShapeDtypeStruct((n_rows, c_pad), jnp.bfloat16),
        compiler_params=cparams,
    )(a_p, xw1, w2_p, b1_p)

    # Layer-2 aggregation contracts over source nodes 0..n128-1 only (padded
    # rows beyond n128 correspond to zero columns of A anyway).
    hw2_src = hw2[:n128, :]

    # ---- layer 2: log_softmax(A @ HW2 + b2) --------------------------------
    out_p = pl.pallas_call(
        functools.partial(_gcn_layer2_kernel, num_classes=num_classes),
        grid=grid,
        in_specs=[row_tile(n128),                    # A row tile, streamed
                  resident((n128, c_pad)),           # HW2 (small, resident)
                  resident((1, c_pad))],             # b2
        out_specs=row_tile(c_pad),
        out_shape=jax.ShapeDtypeStruct((n_rows, c_pad), jnp.float32),
        compiler_params=cparams,
    )(a_p, hw2_src, b2_p)

    return out_p


def gcn_forward(a_hat, x, w1, b1, w2, b2):
    """Convenience wrapper: pad + run + slice.  For repeated calls, pad once
    with pad_gcn_inputs() and call gcn_forward_padded() directly."""
    n = x.shape[0]
    c = w2.shape[1]
    padded, plan = pad_gcn_inputs(a_hat, x, w1, b1, w2, b2)
    out_p = gcn_forward_padded(*padded, num_classes=c, tm=plan["tm"])
    return out_p[:n, :c]


# ----------------------------------------------------------------------------- glue
def build_normalized_adjacency(edge_index, num_nodes):
    """Dense A_hat = D^{-1/2} (A + I_remaining) D^{-1/2} from a (2, E) edge_index.

    Scatter-add counts duplicate edges; self-loops are added only for nodes
    that do not already have one (matches PyG's add_remaining_self_loops).
    """
    src, dst = edge_index[0], edge_index[1]
    a = jnp.zeros((num_nodes, num_nodes), dtype=jnp.float32)
    a = a.at[dst, src].add(1.0)                      # message flows src -> dst
    diag = jnp.diagonal(a)
    a = a + jnp.diag(jnp.where(diag > 0, 0.0, 1.0))  # add *remaining* self loops
    deg = jnp.sum(a, axis=1)
    dinv = jnp.where(deg > 0, 1.0 / jnp.sqrt(deg), 0.0)
    return dinv[:, None] * a * dinv[None, :]


def glorot(key, shape):
    limit = jnp.sqrt(6.0 / (shape[0] + shape[1]))
    return jax.random.uniform(key, shape, jnp.float32, -limit, limit)


def gcn_reference(a_hat, x, w1, b1, w2, b2):
    h = jnp.maximum(a_hat @ (x @ w1) + b1, 0.0)
    z = a_hat @ (h @ w2) + b2
    return jax.nn.log_softmax(z, axis=1)


if __name__ == "__main__":
    # Small, forward-consistent shapes (num_features=16, hidden=32, classes=8).
    N, F_IN, HIDDEN, C, E = 64, 16, 32, 8, 128

    key = jax.random.PRNGKey(0)
    k_x, k_e, k_w1, k_w2 = jax.random.split(key, 4)

    x = jax.random.normal(k_x, (N, F_IN), dtype=jnp.float32)
    ei = jax.random.randint(k_e, (2, E), 0, N, dtype=jnp.int32)
    edge_index = jnp.concatenate([ei, ei[::-1]], axis=1)      # symmetrize

    w1 = glorot(k_w1, (F_IN, HIDDEN))
    b1 = jnp.zeros((1, HIDDEN), dtype=jnp.float32)
    w2 = glorot(k_w2, (HIDDEN, C))
    b2 = jnp.zeros((1, C), dtype=jnp.float32)

    a_hat = build_normalized_adjacency(edge_index, N)

    out = jax.block_until_ready(gcn_forward(a_hat, x, w1, b1, w2, b2))

    # Sanity checks: shape, normalized rows, closeness to f32 reference
    # (bf16 MXU operands with f32 accumulation -> generous tolerance).
    assert out.shape == (N, C)
    row_prob = jnp.sum(jnp.exp(out), axis=1)
    assert jnp.allclose(row_prob, 1.0, atol=1e-4)
    ref = gcn_reference(a_hat, x, w1, b1, w2, b2)
    assert jnp.allclose(out, ref, atol=0.25), float(jnp.max(jnp.abs(out - ref)))

    print("KERNEL_OK")
</pallas_src>

<mosaic_0001>
module attributes {stable_mosaic.version = 11 : i64} {
  func.func @_gcn_layer2_kernel(%arg0: i32, %arg1: memref<128x128xbf16, #tpu.memory_space<vmem>>, %arg2: memref<128x128xbf16, #tpu.memory_space<vmem>>, %arg3: memref<1x128xf32, #tpu.memory_space<vmem>>, %arg4: memref<128x128xf32, #tpu.memory_space<vmem>>) attributes {dimension_semantics = [#tpu.dimension_semantics<parallel>], iteration_bounds = array<i64: 1>, scalar_prefetch = 0 : i64, scratch_operands = 0 : i64, tpu.core_type = #tpu.core_type<tc>, window_params = [{transform_indices = @transform_0, window_bounds = array<i64: 128, 128>}, {pipeline_mode = #tpu.pipeline_mode<synchronous>, transform_indices = @transform_1, window_bounds = array<i64: 128, 128>}, {pipeline_mode = #tpu.pipeline_mode<synchronous>, transform_indices = @transform_2, window_bounds = array<i64: 1, 128>}, {transform_indices = @transform_3, window_bounds = array<i64: 128, 128>}]} {
    %c0 = arith.constant 0 : index
    %c0_0 = arith.constant 0 : index
    %0 = vector.load %arg1[%c0, %c0_0] : memref<128x128xbf16, #tpu.memory_space<vmem>>, vector<128x128xbf16>
    %c0_1 = arith.constant 0 : index
    %c0_2 = arith.constant 0 : index
    %1 = vector.load %arg2[%c0_1, %c0_2] : memref<128x128xbf16, #tpu.memory_space<vmem>>, vector<128x128xbf16>
    %cst = arith.constant dense<0.000000e+00> : vector<128x128xf32>
    %2 = tpu.matmul %0, %1, %cst {dimension_numbers = #tpu.dot_dimension_numbers<[1], [0], [0], [1], [0, 0, 1, 1], [], []>} : vector<128x128xbf16>, vector<128x128xbf16>, vector<128x128xf32> -> vector<128x128xf32>
    %c0_3 = arith.constant 0 : index
    %c0_4 = arith.constant 0 : index
    %3 = vector.load %arg3[%c0_3, %c0_4] : memref<1x128xf32, #tpu.memory_space<vmem>>, vector<1x128xf32>
    %4 = vector.broadcast %3 : vector<1x128xf32> to vector<128x128xf32>
    %5 = arith.addf %2, %4 : vector<128x128xf32>
    %6 = tpu.iota {dimensions = array<i32: 1>} : vector<128x128xi32>
    %c8_i32 = arith.constant 8 : i32
    %7 = vector.broadcast %c8_i32 : i32 to vector<128x128xi32>
    %8 = arith.cmpi slt, %6, %7 : vector<128x128xi32>
    %cst_5 = arith.constant 0xFF800000 : f32
    %9 = vector.broadcast %cst_5 : f32 to vector<128x128xf32>
    %10 = arith.select %8, %5, %9 : vector<128x128xi1>, vector<128x128xf32>
    %cst_6 = arith.constant dense<0xFF800000> : vector<128xf32>
    %11 = vector.multi_reduction <maximumf>, %10, %cst_6 [1] : vector<128x128xf32> to vector<128xf32>
    %12 = vector.shape_cast %11 : vector<128xf32> to vector<128x1xf32>
    %13 = vector.broadcast %12 : vector<128x1xf32> to vector<128x128xf32>
    %14 = arith.subf %10, %13 : vector<128x128xf32>
    %15 = math.exp %14 : vector<128x128xf32>
    %cst_7 = arith.constant dense<0.000000e+00> : vector<128xf32>
    %16 = vector.multi_reduction <add>, %15, %cst_7 [1] : vector<128x128xf32> to vector<128xf32>
    %17 = vector.shape_cast %16 : vector<128xf32> to vector<128x1xf32>
    %18 = math.log %17 : vector<128x1xf32>
    %19 = vector.broadcast %18 : vector<128x1xf32> to vector<128x128xf32>
    %20 = arith.subf %14, %19 : vector<128x128xf32>
    %c0_8 = arith.constant 0 : index
    %c0_9 = arith.constant 0 : index
    %21 = vector.load %arg4[%c0_8, %c0_9] : memref<128x128xf32, #tpu.memory_space<vmem>>, vector<128x128xf32>
    tpu.vector_store %arg4[%c0_8, %c0_9], %20 {strides = array<i32>} : memref<128x128xf32, #tpu.memory_space<vmem>>, vector<128x128xf32>,
    return
  }
  func.func @transform_0(%arg0: i32) -> (i32, i32) {
    %c0_i32 = arith.constant 0 : i32
    %c0_i32_0 = arith.constant 0 : i32
    return %arg0, %c0_i32 : i32, i32
  }
  func.func @transform_1(%arg0: i32) -> (i32, i32) {
    %c0_i32 = arith.constant 0 : i32
    %c0_i32_0 = arith.constant 0 : i32
    %c0_i32_1 = arith.constant 0 : i32
    return %c0_i32, %c0_i32_0 : i32, i32
  }
  func.func @transform_2(%arg0: i32) -> (i32, i32) {
    %c0_i32 = arith.constant 0 : i32
    %c0_i32_0 = arith.constant 0 : i32
    %c0_i32_1 = arith.constant 0 : i32
    return %c0_i32, %c0_i32_0 : i32, i32
  }
  func.func @transform_3(%arg0: i32) -> (i32, i32) {
    %c0_i32 = arith.constant 0 : i32
    %c0_i32_0 = arith.constant 0 : i32
    return %arg0, %c0_i32 : i32, i32
  }
}

module attributes {stable_mosaic.version = 11 : i64} {
  func.func @_gcn_layer1_kernel(%arg0: i32, %arg1: memref<128x128xbf16, #tpu.memory_space<vmem>>, %arg2: memref<128x128xbf16, #tpu.memory_space<vmem>>, %arg3: memref<128x128xbf16, #tpu.memory_space<vmem>>, %arg4: memref<1x128xf32, #tpu.memory_space<vmem>>, %arg5: memref<128x128xbf16, #tpu.memory_space<vmem>>) attributes {dimension_semantics = [#tpu.dimension_semantics<parallel>], iteration_bounds = array<i64: 1>, scalar_prefetch = 0 : i64, scratch_operands = 0 : i64, tpu.core_type = #tpu.core_type<tc>, window_params = [{transform_indices = @transform_0, window_bounds = array<i64: 128, 128>}, {pipeline_mode = #tpu.pipeline_mode<synchronous>, transform_indices = @transform_1, window_bounds = array<i64: 128, 128>}, {pipeline_mode = #tpu.pipeline_mode<synchronous>, transform_indices = @transform_2, window_bounds = array<i64: 128, 128>}, {pipeline_mode = #tpu.pipeline_mode<synchronous>, transform_indices = @transform_3, window_bounds = array<i64: 1, 128>}, {transform_indices = @transform_4, window_bounds = array<i64: 128, 128>}]} {
    %c0 = arith.constant 0 : index
    %c0_0 = arith.constant 0 : index
    %0 = vector.load %arg1[%c0, %c0_0] : memref<128x128xbf16, #tpu.memory_space<vmem>>, vector<128x128xbf16>
    %c0_1 = arith.constant 0 : index
    %c0_2 = arith.constant 0 : index
    %1 = vector.load %arg2[%c0_1, %c0_2] : memref<128x128xbf16, #tpu.memory_space<vmem>>, vector<128x128xbf16>
    %cst = arith.constant dense<0.000000e+00> : vector<128x128xf32>
    %2 = tpu.matmul %0, %1, %cst {dimension_numbers = #tpu.dot_dimension_numbers<[1], [0], [0], [1], [0, 0, 1, 1], [], []>} : vector<128x128xbf16>, vector<128x128xbf16>, vector<128x128xf32> -> vector<128x128xf32>
    %c0_3 = arith.constant 0 : index
    %c0_4 = arith.constant 0 : index
    %3 = vector.load %arg4[%c0_3, %c0_4] : memref<1x128xf32, #tpu.memory_space<vmem>>, vector<1x128xf32>
    %4 = vector.broadcast %3 : vector<1x128xf32> to vector<128x128xf32>
    %5 = arith.addf %2, %4 : vector<128x128xf32>
    %cst_5 = arith.constant 0.000000e+00 : f32
    %6 = vector.broadcast %cst_5 : f32 to vector<128x128xf32>
    %7 = arith.maximumf %5, %6 : vector<128x128xf32>
    %8 = arith.truncf %7 : vector<128x128xf32> to vector<128x128xbf16>
    %c0_6 = arith.constant 0 : index
    %c0_7 = arith.constant 0 : index
    %9 = vector.load %arg3[%c0_6, %c0_7] : memref<128x128xbf16, #tpu.memory_space<vmem>>, vector<128x128xbf16>
    %cst_8 = arith.constant dense<0.000000e+00> : vector<128x128xf32>
    %10 = tpu.matmul %8, %9, %cst_8 {dimension_numbers = #tpu.dot_dimension_numbers<[1], [0], [0], [1], [0, 0, 1, 1], [], []>} : vector<128x128xbf16>, vector<128x128xbf16>, vector<128x128xf32> -> vector<128x128xf32>
    %11 = arith.truncf %10 : vector<128x128xf32> to vector<128x128xbf16>
    %c0_9 = arith.constant 0 : index
    %c0_10 = arith.constant 0 : index
    %12 = vector.load %arg5[%c0_9, %c0_10] : memref<128x128xbf16, #tpu.memory_space<vmem>>, vector<128x128xbf16>
    tpu.vector_store %arg5[%c0_9, %c0_10], %11 {strides = array<i32>} : memref<128x128xbf16, #tpu.memory_space<vmem>>, vector<128x128xbf16>,
    return
  }
  func.func @transform_0(%arg0: i32) -> (i32, i32) {
    %c0_i32 = arith.constant 0 : i32
    %c0_i32_0 = arith.constant 0 : i32
    return %arg0, %c0_i32 : i32, i32
  }
  func.func @transform_1(%arg0: i32) -> (i32, i32) {
    %c0_i32 = arith.constant 0 : i32
    %c0_i32_0 = arith.constant 0 : i32
    %c0_i32_1 = arith.constant 0 : i32
    return %c0_i32, %c0_i32_0 : i32, i32
  }
  func.func @transform_2(%arg0: i32) -> (i32, i32) {
    %c0_i32 = arith.constant 0 : i32
    %c0_i32_0 = arith.constant 0 : i32
    %c0_i32_1 = arith.constant 0 : i32
    return %c0_i32, %c0_i32_0 : i32, i32
  }
  func.func @transform_3(%arg0: i32) -> (i32, i32) {
    %c0_i32 = arith.constant 0 : i32
    %c0_i32_0 = arith.constant 0 : i32
    %c0_i32_1 = arith.constant 0 : i32
    return %c0_i32, %c0_i32_0 : i32, i32
  }
  func.func @transform_4(%arg0: i32) -> (i32, i32) {
    %c0_i32 = arith.constant 0 : i32
    %c0_i32_0 = arith.constant 0 : i32
    return %arg0, %c0_i32 : i32, i32
  }
}

</mosaic_0001>

<llo_original>
// kernel: gcn_forward_padded.3
$region0: #{gcn_forward_padded.3}
  #allocation0 [shape = 'u32[]', space=smem, size = 0x4, offset = 0x4, fixed_abs, tag = 'smem constant byte address 0x4 - core index']
  #allocation1 [shape = 'u32[72,128]{1,0:T(1,128)}', space=vmem, size = 0x9000, scoped, tag = 'internal scratch']
  %s0 = inlined_call_operand.vmem [shape: bf16[128,128], index: 0, kind: input, shape index: {}]
  %s1 = inlined_call_operand.vmem [shape: bf16[128,128], index: 1, kind: input, shape index: {}]
  %s2 = inlined_call_operand.vmem [shape: f32[1,128], index: 2, kind: input, shape index: {}]
  %s3 = inlined_call_operand.hbm [shape: f32[128,128], index: 3, kind: output, shape index: {}]
  %s4 = sld [smem:[#allocation0]]
  $region22: #{gcn_forward_padded.3} parent=0
    _
  %s6 = ssub.s32 1, %s4
  %s7 = scalar_select 0, %s6, %s4
  $region1: #{gcn_forward_padded.3} parent=0
    #allocation2 [shape = 'u8[65536]{0}', space=vmem, size = 0x10000, scoped, tag = 'output window, operand 0, single buffered']
    #allocation3 [shape = 's32[1]{0}', space=sflag, size = 0x4, scoped, tag = 'scoped memory for gcn_forward_padded.3']
    %8 = vsyncpa [#allocation3], 0
    // Predicated region
    $region2: #{gcn_forward_padded.3} parent=1 // pred_check
      _
    $region3: #{gcn_forward_padded.3} parent=1 // pred_check_branch
      %10 = sbr.rel (0) target = $region5
    $region4: #{gcn_forward_padded.3} parent=1 // pred_region
      _
    $region5: #{gcn_forward_padded.3} parent=1 // pred_fallthru
      _
    // Predicated region
    $region6: #{gcn_forward_padded.3} parent=1 // pred_check
      _
    $region7: #{gcn_forward_padded.3} parent=1 // pred_check_branch
      %12 = sbr.rel (0) target = $region9
    $region8: #{gcn_forward_padded.3} parent=1 // pred_region
      _
    $region9: #{gcn_forward_padded.3} parent=1 // pred_fallthru
      _
    // Predicated region
    $region10: #{gcn_forward_padded.3} parent=1 // pred_check
      _
    $region11: #{gcn_forward_padded.3} parent=1 // pred_check_branch
      %14 = sbr.rel (0) target = $region13
    $region12: #{gcn_forward_padded.3} parent=1 // pred_region
      _
    $region13: #{gcn_forward_padded.3} parent=1 // pred_fallthru
      _
    %v15 = vld [vmem:[%s0] sm:$0xf]
    %v16 = vld [vmem:[%s0 + $0x4] sm:$0xf]
    %v17 = vld [vmem:[%s0 + $0x8] sm:$0xf]
    %v18 = vld [vmem:[%s0 + $0xc] sm:$0xf]
    %v19 = vld [vmem:[%s0 + $0x10] sm:$0xf]
    %v20 = vld [vmem:[%s0 + $0x14] sm:$0xf]
    %v21 = vld [vmem:[%s0 + $0x18] sm:$0xf]
    %v22 = vld [vmem:[%s0 + $0x1c] sm:$0xf]
    %v23 = vld [vmem:[%s0 + $0x20] sm:$0xf]
    %v24 = vld [vmem:[%s0 + $0x24] sm:$0xf]
    %v25 = vld [vmem:[%s0 + $0x28] sm:$0xf]
    %v26 = vld [vmem:[%s0 + $0x2c] sm:$0xf]
    %v27 = vld [vmem:[%s0 + $0x30] sm:$0xf]
    %v28 = vld [vmem:[%s0 + $0x34] sm:$0xf]
    %v29 = vld [vmem:[%s0 + $0x38] sm:$0xf]
    %v30 = vld [vmem:[%s0 + $0x3c] sm:$0xf]
    %v31 = vld [vmem:[%s1] sm:$0xf]
    %v32 = vld [vmem:[%s1 + $0x4] sm:$0xf]
    %v33 = vld [vmem:[%s1 + $0x8] sm:$0xf]
    %v34 = vld [vmem:[%s1 + $0xc] sm:$0xf]
    %v35 = vld [vmem:[%s1 + $0x10] sm:$0xf]
    %v36 = vld [vmem:[%s1 + $0x14] sm:$0xf]
    %v37 = vld [vmem:[%s1 + $0x18] sm:$0xf]
    %v38 = vld [vmem:[%s1 + $0x1c] sm:$0xf]
    %v39 = vld [vmem:[%s1 + $0x20] sm:$0xf]
    %v40 = vld [vmem:[%s1 + $0x24] sm:$0xf]
    %v41 = vld [vmem:[%s1 + $0x28] sm:$0xf]
    %v42 = vld [vmem:[%s1 + $0x2c] sm:$0xf]
    %v43 = vld [vmem:[%s1 + $0x30] sm:$0xf]
    %v44 = vld [vmem:[%s1 + $0x34] sm:$0xf]
    %v45 = vld [vmem:[%s1 + $0x38] sm:$0xf]
    %v46 = vld [vmem:[%s1 + $0x3c] sm:$0xf]
    %v47 = vld [vmem:[%s2] sm:$0x1]
    %v49 = vperm.slane %v47, 0
    %v67 = vunpack.c.l.b16 %v15
    %v68 = vunpack.c.l.b16 %v16
    %v69 = vunpack.c.l.b16 %v17
    %v70 = vunpack.c.l.b16 %v18
    %v71 = vunpack.c.l.b16 %v19
    %v72 = vunpack.c.l.b16 %v20
    %v73 = vunpack.c.l.b16 %v21
    %v74 = vunpack.c.l.b16 %v22
    %v75 = vunpack.c.l.b16 %v23
    %v76 = vunpack.c.l.b16 %v24
    %v77 = vunpack.c.l.b16 %v25
    %v78 = vunpack.c.l.b16 %v26
    %v79 = vunpack.c.l.b16 %v27
    %v80 = vunpack.c.l.b16 %v28
    %v81 = vunpack.c.l.b16 %v29
    %v82 = vunpack.c.l.b16 %v30
    %v83 = vpack.c.b16 %v68, %v67
    %v84 = vpack.c.b16 %v70, %v69
    %v85 = vpack.c.b16 %v72, %v71
    %v86 = vpack.c.b16 %v74, %v73
    %v87 = vpack.c.b16 %v76, %v75
    %v88 = vpack.c.b16 %v78, %v77
    %v89 = vpack.c.b16 %v80, %v79
    %v90 = vpack.c.b16 %v82, %v81
    %v115 = vunpack.c.l.b16 %v31
    %v116 = vunpack.c.l.b16 %v32
    %v117 = vunpack.c.l.b16 %v33
    %v118 = vunpack.c.l.b16 %v34
    %v119 = vunpack.c.l.b16 %v35
    %v120 = vunpack.c.l.b16 %v36
    %v121 = vunpack.c.l.b16 %v37
    %v122 = vunpack.c.l.b16 %v38
    %v123 = vunpack.c.l.b16 %v39
    %v124 = vunpack.c.l.b16 %v40
    %v125 = vunpack.c.l.b16 %v41
    %v126 = vunpack.c.l.b16 %v42
    %v127 = vunpack.c.l.b16 %v43
    %v128 = vunpack.c.l.b16 %v44
    %v129 = vunpack.c.l.b16 %v45
    %v130 = vunpack.c.l.b16 %v46
    %v131 = vpack.c.b16 %v116, %v115
    %v132 = vpack.c.b16 %v118, %v117
    %v133 = vpack.c.b16 %v120, %v119
    %v134 = vpack.c.b16 %v122, %v121
    %v135 = vpack.c.b16 %v124, %v123
    %v136 = vpack.c.b16 %v126, %v125
    %v137 = vpack.c.b16 %v128, %v127
    %v138 = vpack.c.b16 %v130, %v129
    %147 = vmatpush.bf16.msra.mxu0 %v138
    %148 = vmatpush.bf16.msra.mxu0 %v137
    %149 = vmatpush.bf16.msra.mxu0 %v136
    %150 = vmatpush.bf16.msra.mxu0 %v135
    %151 = vmatpush.bf16.msra.mxu0 %v134
    %152 = vmatpush.bf16.msra.mxu0 %v133
    %153 = vmatpush.bf16.msra.mxu0 %v132
    %154 = vmatpush.bf16.msra.mxu0 %v131
    %155 = vmatmul.bf16.gmra.mxu0 %v83
    %v156 = vpop.f32.mrf.mxu0
    %v157 = vadd.f32 %v49, %v156
    %v158 = vpop.f32.mrf.mxu0
    %v159 = vadd.f32 %v49, %v158
    %160 = vmatmul.bf16.gmra.mxu0 %v84
    %v161 = vpop.f32.mrf.mxu0
    %v162 = vadd.f32 %v49, %v161
    %v163 = vpop.f32.mrf.mxu0
    %v164 = vadd.f32 %v49, %v163
    %165 = vmatmul.bf16.gmra.mxu0 %v85
    %v166 = vpop.f32.mrf.mxu0
    %v167 = vadd.f32 %v49, %v166
    %v168 = vpop.f32.mrf.mxu0
    %v169 = vadd.f32 %v49, %v168
    %170 = vmatmul.bf16.gmra.mxu0 %v86
    %v171 = vpop.f32.mrf.mxu0
    %v172 = vadd.f32 %v49, %v171
    %v173 = vpop.f32.mrf.mxu0
    %v174 = vadd.f32 %v49, %v173
    %175 = vmatmul.bf16.gmra.mxu0 %v87
    %v176 = vpop.f32.mrf.mxu0
    %v177 = vadd.f32 %v49, %v176
    %v178 = vpop.f32.mrf.mxu0
    %v179 = vadd.f32 %v49, %v178
    %180 = vmatmul.bf16.gmra.mxu0 %v88
    %v181 = vpop.f32.mrf.mxu0
    %v182 = vadd.f32 %v49, %v181
    %v183 = vpop.f32.mrf.mxu0
    %v184 = vadd.f32 %v49, %v183
    %185 = vmatmul.bf16.gmra.mxu0 %v89
    %v186 = vpop.f32.mrf.mxu0
    %v187 = vadd.f32 %v49, %v186
    %v188 = vpop.f32.mrf.mxu0
    %v189 = vadd.f32 %v49, %v188
    %190 = vmatmul.bf16.gmra.mxu0 %v90
    %v191 = vpop.f32.mrf.mxu0
    %v192 = vadd.f32 %v49, %v191
    %v193 = vpop.f32.mrf.mxu0
    %v194 = vadd.f32 %v49, %v193
    %195 = vdwg.mxu0
    %v196 = vlaneseq
    %v197 = vand.u32 %v196, 127
    %vm198 = vcmp.lt.s32.totalorder %v197, 8
    %v199 = vsel %vm198, %v157, -inf
    %v200 = vsel %vm198, %v159, -inf
    %v201 = vsel %vm198, %v162, -inf
    %v202 = vsel %vm198, %v164, -inf
    %v203 = vsel %vm198, %v167, -inf
    %v204 = vsel %vm198, %v169, -inf
    %v205 = vsel %vm198, %v172, -inf
    %v206 = vsel %vm198, %v174, -inf
    %v207 = vsel %vm198, %v177, -inf
    %v208 = vsel %vm198, %v179, -inf
    %v209 = vsel %vm198, %v182, -inf
    %v210 = vsel %vm198, %v184, -inf
    %v211 = vsel %vm198, %v187, -inf
    %v212 = vsel %vm198, %v189, -inf
    %v213 = vsel %vm198, %v192, -inf
    %v214 = vsel %vm198, %v194, -inf
    %215 = vmax.xlane.f32.xlu0 %v199
    %v216 = vpop.xlane.xlu0 %215
    %217 = vmax.xlane.f32.xlu0 %v200
    %v218 = vpop.xlane.xlu0 %217
    %219 = vmax.xlane.f32.xlu0 %v201
    %v220 = vpop.xlane.xlu0 %219
    %221 = vmax.xlane.f32.xlu0 %v202
    %v222 = vpop.xlane.xlu0 %221
    %223 = vmax.xlane.f32.xlu0 %v203
    %v224 = vpop.xlane.xlu0 %223
    %225 = vmax.xlane.f32.xlu0 %v204
    %v226 = vpop.xlane.xlu0 %225
    %227 = vmax.xlane.f32.xlu0 %v205
    %v228 = vpop.xlane.xlu0 %227
    %229 = vmax.xlane.f32.xlu0 %v206
    %v230 = vpop.xlane.xlu0 %229
    %231 = vmax.xlane.f32.xlu0 %v207
    %v232 = vpop.xlane.xlu0 %231
    %233 = vmax.xlane.f32.xlu0 %v208
    %v234 = vpop.xlane.xlu0 %233
    %235 = vmax.xlane.f32.xlu0 %v209
    %v236 = vpop.xlane.xlu0 %235
    %237 = vmax.xlane.f32.xlu0 %v210
    %v238 = vpop.xlane.xlu0 %237
    %239 = vmax.xlane.f32.xlu0 %v211
    %v240 = vpop.xlane.xlu0 %239
    %241 = vmax.xlane.f32.xlu0 %v212
    %v242 = vpop.xlane.xlu0 %241
    %243 = vmax.xlane.f32.xlu0 %v213
    %v244 = vpop.xlane.xlu0 %243
    %245 = vmax.xlane.f32.xlu0 %v214
    %v246 = vpop.xlane.xlu0 %245
    %v247 = vsub.f32 %v199, %v216
    %v248 = vsub.f32 %v200, %v218
    %v249 = vsub.f32 %v201, %v220
    %v250 = vsub.f32 %v202, %v222
    %v251 = vsub.f32 %v203, %v224
    %v252 = vsub.f32 %v204, %v226
    %v253 = vsub.f32 %v205, %v228
    %v254 = vsub.f32 %v206, %v230
    %v255 = vsub.f32 %v207, %v232
    %v256 = vsub.f32 %v208, %v234
    %v257 = vsub.f32 %v209, %v236
    %v258 = vsub.f32 %v210, %v238
    %v259 = vsub.f32 %v211, %v240
    %v260 = vsub.f32 %v212, %v242
    %v261 = vsub.f32 %v213, %v244
    %v262 = vsub.f32 %v214, %v246
    %v263 = vmul.f32 %v247, 1.442695
    %v264 = vpow.pop %v263
    %v265 = vmul.f32 %v248, 1.442695
    %v266 = vpow.pop %v265
    %v267 = vmul.f32 %v249, 1.442695
    %v268 = vpow.pop %v267
    %v269 = vmul.f32 %v250, 1.442695
    %v270 = vpow.pop %v269
    %v271 = vmul.f32 %v251, 1.442695
    %v272 = vpow.pop %v271
    %v273 = vmul.f32 %v252, 1.442695
    %v274 = vpow.pop %v273
    %v275 = vmul.f32 %v253, 1.442695
    %v276 = vpow.pop %v275
    %v277 = vmul.f32 %v254, 1.442695
    %v278 = vpow.pop %v277
    %v279 = vmul.f32 %v255, 1.442695
    %v280 = vpow.pop %v279
    %v281 = vmul.f32 %v256, 1.442695
    %v282 = vpow.pop %v281
    %v283 = vmul.f32 %v257, 1.442695
    %v284 = vpow.pop %v283
    %v285 = vmul.f32 %v258, 1.442695
    %v286 = vpow.pop %v285
    %v287 = vmul.f32 %v259, 1.442695
    %v288 = vpow.pop %v287
    %v289 = vmul.f32 %v260, 1.442695
    %v290 = vpow.pop %v289
    %v291 = vmul.f32 %v261, 1.442695
    %v292 = vpow.pop %v291
    %v293 = vmul.f32 %v262, 1.442695
    %v294 = vpow.pop %v293
    %295 = vadd.xlane.f32.xlu0 %v264
    %v296 = vpop.xlane.xlu0 %295
    %297 = vadd.xlane.f32.xlu0 %v266
    %v298 = vpop.xlane.xlu0 %297
    %299 = vadd.xlane.f32.xlu0 %v268
    %v300 = vpop.xlane.xlu0 %299
    %301 = vadd.xlane.f32.xlu0 %v270
    %v302 = vpop.xlane.xlu0 %301
    %303 = vadd.xlane.f32.xlu0 %v272
    %v304 = vpop.xlane.xlu0 %303
    %305 = vadd.xlane.f32.xlu0 %v274
    %v306 = vpop.xlane.xlu0 %305
    %307 = vadd.xlane.f32.xlu0 %v276
    %v308 = vpop.xlane.xlu0 %307
    %309 = vadd.xlane.f32.xlu0 %v278
    %v310 = vpop.xlane.xlu0 %309
    %311 = vadd.xlane.f32.xlu0 %v280
    %v312 = vpop.xlane.xlu0 %311
    %313 = vadd.xlane.f32.xlu0 %v282
    %v314 = vpop.xlane.xlu0 %313
    %315 = vadd.xlane.f32.xlu0 %v284
    %v316 = vpop.xlane.xlu0 %315
    %317 = vadd.xlane.f32.xlu0 %v286
    %v318 = vpop.xlane.xlu0 %317
    %319 = vadd.xlane.f32.xlu0 %v288
    %v320 = vpop.xlane.xlu0 %319
    %321 = vadd.xlane.f32.xlu0 %v290
    %v322 = vpop.xlane.xlu0 %321
    %323 = vadd.xlane.f32.xlu0 %v292
    %v324 = vpop.xlane.xlu0 %323
    %325 = vadd.xlane.f32.xlu0 %v294
    %v326 = vpop.xlane.xlu0 %325
    %v327 = vlog2.pop %v296
    %v328 = vmul.f32 %v327, 0.6931472
    %v329 = vlog2.pop %v298
    %v330 = vmul.f32 %v329, 0.6931472
    %v331 = vlog2.pop %v300
    %v332 = vmul.f32 %v331, 0.6931472
    %v333 = vlog2.pop %v302
    %v334 = vmul.f32 %v333, 0.6931472
    %v335 = vlog2.pop %v304
    %v336 = vmul.f32 %v335, 0.6931472
    %v337 = vlog2.pop %v306
    %v338 = vmul.f32 %v337, 0.6931472
    %v339 = vlog2.pop %v308
    %v340 = vmul.f32 %v339, 0.6931472
    %v341 = vlog2.pop %v310
    %v342 = vmul.f32 %v341, 0.6931472
    %v343 = vlog2.pop %v312
    %v344 = vmul.f32 %v343, 0.6931472
    %v345 = vlog2.pop %v314
    %v346 = vmul.f32 %v345, 0.6931472
    %v347 = vlog2.pop %v316
    %v348 = vmul.f32 %v347, 0.6931472
    %v349 = vlog2.pop %v318
    %v350 = vmul.f32 %v349, 0.6931472
    %v351 = vlog2.pop %v320
    %v352 = vmul.f32 %v351, 0.6931472
    %v353 = vlog2.pop %v322
    %v354 = vmul.f32 %v353, 0.6931472
    %v355 = vlog2.pop %v324
    %v356 = vmul.f32 %v355, 0.6931472
    %v357 = vlog2.pop %v326
    %v358 = vmul.f32 %v357, 0.6931472
    %v359 = vsub.f32 %v247, %v328
    %v360 = vsub.f32 %v248, %v330
    %v361 = vsub.f32 %v249, %v332
    %v362 = vsub.f32 %v250, %v334
    %v363 = vsub.f32 %v251, %v336
    %v364 = vsub.f32 %v252, %v338
    %v365 = vsub.f32 %v253, %v340
    %v366 = vsub.f32 %v254, %v342
    %v367 = vsub.f32 %v255, %v344
    %v368 = vsub.f32 %v256, %v346
    %v369 = vsub.f32 %v257, %v348
    %v370 = vsub.f32 %v258, %v350
    %v371 = vsub.f32 %v259, %v352
    %v372 = vsub.f32 %v260, %v354
    %v373 = vsub.f32 %v261, %v356
    %v374 = vsub.f32 %v262, %v358
    %375 = vst [vmem:[#allocation2] sm:$0xff] %v359
    %376 = vst [vmem:[#allocation2 + $0x8] sm:$0xff] %v360
    %377 = vst [vmem:[#allocation2 + $0x10] sm:$0xff] %v361
    %378 = vst [vmem:[#allocation2 + $0x18] sm:$0xff] %v362
    %379 = vst [vmem:[#allocation2 + $0x20] sm:$0xff] %v363
    %380 = vst [vmem:[#allocation2 + $0x28] sm:$0xff] %v364
    %381 = vst [vmem:[#allocation2 + $0x30] sm:$0xff] %v365
    %382 = vst [vmem:[#allocation2 + $0x38] sm:$0xff] %v366
    %383 = vst [vmem:[#allocation2 + $0x40] sm:$0xff] %v367
    %384 = vst [vmem:[#allocation2 + $0x48] sm:$0xff] %v368
    %385 = vst [vmem:[#allocation2 + $0x50] sm:$0xff] %v369
    %386 = vst [vmem:[#allocation2 + $0x58] sm:$0xff] %v370
    %387 = vst [vmem:[#allocation2 + $0x60] sm:$0xff] %v371
    %388 = vst [vmem:[#allocation2 + $0x68] sm:$0xff] %v372
    %389 = vst [vmem:[#allocation2 + $0x70] sm:$0xff] %v373
    %390 = vst [vmem:[#allocation2 + $0x78] sm:$0xff] %v374
    // Predicated region
    $region14: #{gcn_forward_padded.3} parent=1 // pred_check
      _
    $region15: #{gcn_forward_padded.3} parent=1 // pred_check_branch
      %392 = sbr.rel (0) target = $region17
    $region16: #{gcn_forward_padded.3} parent=1 // pred_region
      %394 = vsyncadd [#allocation3], 0
      %s395 = sshll.u32 [#allocation2], 4
      %s396 = int_to_ptr.vmem [resolvable:$true] %s395
      %s397 = sshll.u32 %s3, 4
      %s398 = int_to_ptr.hbm [resolvable:$true] %s397
      %403 = dma.vmem_to_hbm [thread:$0]  %s396, 2048, %s398, [#allocation3], 128, 128, 8
    $region17: #{gcn_forward_padded.3} parent=1 // pred_fallthru
      _
    // Predicated region
    $region18: #{gcn_forward_padded.3} parent=1 // pred_check
      _
    $region19: #{gcn_forward_padded.3} parent=1 // pred_check_branch
      %405 = sbr.rel (0) target = $region21
    $region20: #{gcn_forward_padded.3} parent=1 // pred_region
      %407 = dma.done [#allocation3], 2048
    $region21: #{gcn_forward_padded.3} parent=1 // pred_fallthru
      _
    %408 = vsyncpa [#allocation3], 1

// kernel: gcn_forward_padded.2
$region0: #{gcn_forward_padded.2}
  #allocation0 [shape = 'u32[]', space=smem, size = 0x4, offset = 0x4, fixed_abs, tag = 'smem constant byte address 0x4 - core index']
  #allocation1 [shape = 'u32[72,128]{1,0:T(1,128)}', space=vmem, size = 0x9000, scoped, tag = 'internal scratch']
  %s0 = inlined_call_operand.vmem [shape: bf16[128,128], index: 0, kind: input, shape index: {}]
  %s1 = inlined_call_operand.vmem [shape: bf16[128,128], index: 1, kind: input, shape index: {}]
  %s2 = inlined_call_operand.vmem [shape: bf16[128,128], index: 2, kind: input, shape index: {}]
  %s3 = inlined_call_operand.vmem [shape: f32[1,128], index: 3, kind: input, shape index: {}]
  %s4 = inlined_call_operand.vmem [shape: bf16[128,128], index: 4, kind: output, shape index: {}]
  %s5 = sld [smem:[#allocation0]]
  $region26: #{gcn_forward_padded.2} parent=0
    _
  %s7 = ssub.s32 1, %s5
  %s8 = scalar_select 0, %s7, %s5
  // Predicated region
  $region2: #{gcn_forward_padded.2} parent=0 // pred_check
    _
  $region3: #{gcn_forward_padded.2} parent=0 // pred_check_branch
    %10 = sbr.rel (0) target = $region5
  $region4: #{gcn_forward_padded.2} parent=0 // pred_region
    _
  $region5: #{gcn_forward_padded.2} parent=0 // pred_fallthru
    _
  // Predicated region
  $region6: #{gcn_forward_padded.2} parent=0 // pred_check
    _
  $region7: #{gcn_forward_padded.2} parent=0 // pred_check_branch
    %12 = sbr.rel (0) target = $region9
  $region8: #{gcn_forward_padded.2} parent=0 // pred_region
    _
  $region9: #{gcn_forward_padded.2} parent=0 // pred_fallthru
    _
  // Predicated region
  $region10: #{gcn_forward_padded.2} parent=0 // pred_check
    _
  $region11: #{gcn_forward_padded.2} parent=0 // pred_check_branch
    %14 = sbr.rel (0) target = $region13
  $region12: #{gcn_forward_padded.2} parent=0 // pred_region
    _
  $region13: #{gcn_forward_padded.2} parent=0 // pred_fallthru
    _
  // Predicated region
  $region14: #{gcn_forward_padded.2} parent=0 // pred_check
    _
  $region15: #{gcn_forward_padded.2} parent=0 // pred_check_branch
    %16 = sbr.rel (0) target = $region17
  $region16: #{gcn_forward_padded.2} parent=0 // pred_region
    _
  $region17: #{gcn_forward_padded.2} parent=0 // pred_fallthru
    _
  %v17 = vld [vmem:[%s0] sm:$0xf]
  %v18 = vld [vmem:[%s0 + $0x4] sm:$0xf]
  %v19 = vld [vmem:[%s0 + $0x8] sm:$0xf]
  %v20 = vld [vmem:[%s0 + $0xc] sm:$0xf]
  %v21 = vld [vmem:[%s0 + $0x10] sm:$0xf]
  %v22 = vld [vmem:[%s0 + $0x14] sm:$0xf]
  %v23 = vld [vmem:[%s0 + $0x18] sm:$0xf]
  %v24 = vld [vmem:[%s0 + $0x1c] sm:$0xf]
  %v25 = vld [vmem:[%s0 + $0x20] sm:$0xf]
  %v26 = vld [vmem:[%s0 + $0x24] sm:$0xf]
  %v27 = vld [vmem:[%s0 + $0x28] sm:$0xf]
  %v28 = vld [vmem:[%s0 + $0x2c] sm:$0xf]
  %v29 = vld [vmem:[%s0 + $0x30] sm:$0xf]
  %v30 = vld [vmem:[%s0 + $0x34] sm:$0xf]
  %v31 = vld [vmem:[%s0 + $0x38] sm:$0xf]
  %v32 = vld [vmem:[%s0 + $0x3c] sm:$0xf]
  %v33 = vld [vmem:[%s1] sm:$0xf]
  %v34 = vld [vmem:[%s1 + $0x4] sm:$0xf]
  %v35 = vld [vmem:[%s1 + $0x8] sm:$0xf]
  %v36 = vld [vmem:[%s1 + $0xc] sm:$0xf]
  %v37 = vld [vmem:[%s1 + $0x10] sm:$0xf]
  %v38 = vld [vmem:[%s1 + $0x14] sm:$0xf]
  %v39 = vld [vmem:[%s1 + $0x18] sm:$0xf]
  %v40 = vld [vmem:[%s1 + $0x1c] sm:$0xf]
  %v41 = vld [vmem:[%s1 + $0x20] sm:$0xf]
  %v42 = vld [vmem:[%s1 + $0x24] sm:$0xf]
  %v43 = vld [vmem:[%s1 + $0x28] sm:$0xf]
  %v44 = vld [vmem:[%s1 + $0x2c] sm:$0xf]
  %v45 = vld [vmem:[%s1 + $0x30] sm:$0xf]
  %v46 = vld [vmem:[%s1 + $0x34] sm:$0xf]
  %v47 = vld [vmem:[%s1 + $0x38] sm:$0xf]
  %v48 = vld [vmem:[%s1 + $0x3c] sm:$0xf]
  %v49 = vld [vmem:[%s3] sm:$0x1]
  %v51 = vperm.slane %v49, 0
  %v69 = vunpack.c.l.b16 %v17
  %v70 = vunpack.c.l.b16 %v18
  %v71 = vunpack.c.l.b16 %v19
  %v72 = vunpack.c.l.b16 %v20
  %v73 = vunpack.c.l.b16 %v21
  %v74 = vunpack.c.l.b16 %v22
  %v75 = vunpack.c.l.b16 %v23
  %v76 = vunpack.c.l.b16 %v24
  %v77 = vunpack.c.l.b16 %v25
  %v78 = vunpack.c.l.b16 %v26
  %v79 = vunpack.c.l.b16 %v27
  %v80 = vunpack.c.l.b16 %v28
  %v81 = vunpack.c.l.b16 %v29
  %v82 = vunpack.c.l.b16 %v30
  %v83 = vunpack.c.l.b16 %v31
  %v84 = vunpack.c.l.b16 %v32
  %v85 = vpack.c.b16 %v70, %v69
  %v86 = vpack.c.b16 %v72, %v71
  %v87 = vpack.c.b16 %v74, %v73
  %v88 = vpack.c.b16 %v76, %v75
  %v89 = vpack.c.b16 %v78, %v77
  %v90 = vpack.c.b16 %v80, %v79
  %v91 = vpack.c.b16 %v82, %v81
  %v92 = vpack.c.b16 %v84, %v83
  %v117 = vunpack.c.l.b16 %v33
  %v118 = vunpack.c.l.b16 %v34
  %v119 = vunpack.c.l.b16 %v35
  %v120 = vunpack.c.l.b16 %v36
  %v121 = vunpack.c.l.b16 %v37
  %v122 = vunpack.c.l.b16 %v38
  %v123 = vunpack.c.l.b16 %v39
  %v124 = vunpack.c.l.b16 %v40
  %v125 = vunpack.c.l.b16 %v41
  %v126 = vunpack.c.l.b16 %v42
  %v127 = vunpack.c.l.b16 %v43
  %v128 = vunpack.c.l.b16 %v44
  %v129 = vunpack.c.l.b16 %v45
  %v130 = vunpack.c.l.b16 %v46
  %v131 = vunpack.c.l.b16 %v47
  %v132 = vunpack.c.l.b16 %v48
  %v133 = vpack.c.b16 %v118, %v117
  %v134 = vpack.c.b16 %v120, %v119
  %v135 = vpack.c.b16 %v122, %v121
  %v136 = vpack.c.b16 %v124, %v123
  %v137 = vpack.c.b16 %v126, %v125
  %v138 = vpack.c.b16 %v128, %v127
  %v139 = vpack.c.b16 %v130, %v129
  %v140 = vpack.c.b16 %v132, %v131
  %149 = vmatpush.bf16.msra.mxu0 %v140
  %150 = vmatpush.bf16.msra.mxu0 %v139
  %151 = vmatpush.bf16.msra.mxu0 %v138
  %152 = vmatpush.bf16.msra.mxu0 %v137
  %153 = vmatpush.bf16.msra.mxu0 %v136
  %154 = vmatpush.bf16.msra.mxu0 %v135
  %155 = vmatpush.bf16.msra.mxu0 %v134
  %156 = vmatpush.bf16.msra.mxu0 %v133
  %157 = vmatmul.bf16.gmra.mxu0 %v85
  %v158 = vpop.f32.mrf.mxu0
  %v159 = vadd.f32 %v51, %v158
  %v160 = vpop.f32.mrf.mxu0
  %v161 = vadd.f32 %v51, %v160
  %162 = vmatmul.bf16.gmra.mxu0 %v86
  %v163 = vpop.f32.mrf.mxu0
  %v164 = vadd.f32 %v51, %v163
  %v165 = vpop.f32.mrf.mxu0
  %v166 = vadd.f32 %v51, %v165
  %167 = vmatmul.bf16.gmra.mxu0 %v87
  %v168 = vpop.f32.mrf.mxu0
  %v169 = vadd.f32 %v51, %v168
  %v170 = vpop.f32.mrf.mxu0
  %v171 = vadd.f32 %v51, %v170
  %172 = vmatmul.bf16.gmra.mxu0 %v88
  %v173 = vpop.f32.mrf.mxu0
  %v174 = vadd.f32 %v51, %v173
  %v175 = vpop.f32.mrf.mxu0
  %v176 = vadd.f32 %v51, %v175
  %177 = vmatmul.bf16.gmra.mxu0 %v89
  %v178 = vpop.f32.mrf.mxu0
  %v179 = vadd.f32 %v51, %v178
  %v180 = vpop.f32.mrf.mxu0
  %v181 = vadd.f32 %v51, %v180
  %182 = vmatmul.bf16.gmra.mxu0 %v90
  %v183 = vpop.f32.mrf.mxu0
  %v184 = vadd.f32 %v51, %v183
  %v185 = vpop.f32.mrf.mxu0
  %v186 = vadd.f32 %v51, %v185
  %187 = vmatmul.bf16.gmra.mxu0 %v91
  %v188 = vpop.f32.mrf.mxu0
  %v189 = vadd.f32 %v51, %v188
  %v190 = vpop.f32.mrf.mxu0
  %v191 = vadd.f32 %v51, %v190
  %192 = vmatmul.bf16.gmra.mxu0 %v92
  %v193 = vpop.f32.mrf.mxu0
  %v194 = vadd.f32 %v51, %v193
  %v195 = vpop.f32.mrf.mxu0
  %v196 = vadd.f32 %v51, %v195
  %197 = vdwg.mxu0
  %v198 = vmax.f32 %v159, 0.0
  %v199 = vmax.f32 %v161, 0.0
  %v200 = vmax.f32 %v164, 0.0
  %v201 = vmax.f32 %v166, 0.0
  %v202 = vmax.f32 %v169, 0.0
  %v203 = vmax.f32 %v171, 0.0
  %v204 = vmax.f32 %v174, 0.0
  %v205 = vmax.f32 %v176, 0.0
  %v206 = vmax.f32 %v179, 0.0
  %v207 = vmax.f32 %v181, 0.0
  %v208 = vmax.f32 %v184, 0.0
  %v209 = vmax.f32 %v186, 0.0
  %v210 = vmax.f32 %v189, 0.0
  %v211 = vmax.f32 %v191, 0.0
  %v212 = vmax.f32 %v194, 0.0
  %v213 = vmax.f32 %v196, 0.0
  %v214 = vpack.c.bf16 %v199, %v198
  %v215 = vpack.c.bf16 %v201, %v200
  %v216 = vpack.c.bf16 %v203, %v202
  %v217 = vpack.c.bf16 %v205, %v204
  %v218 = vpack.c.bf16 %v207, %v206
  %v219 = vpack.c.bf16 %v209, %v208
  %v220 = vpack.c.bf16 %v211, %v210
  %v221 = vpack.c.bf16 %v213, %v212
  %v222 = vld [vmem:[%s2] sm:$0xf]
  %v223 = vld [vmem:[%s2 + $0x4] sm:$0xf]
  %v224 = vld [vmem:[%s2 + $0x8] sm:$0xf]
  %v225 = vld [vmem:[%s2 + $0xc] sm:$0xf]
  %v226 = vld [vmem:[%s2 + $0x10] sm:$0xf]
  %v227 = vld [vmem:[%s2 + $0x14] sm:$0xf]
  %v228 = vld [vmem:[%s2 + $0x18] sm:$0xf]
  %v229 = vld [vmem:[%s2 + $0x1c] sm:$0xf]
  %v230 = vld [vmem:[%s2 + $0x20] sm:$0xf]
  %v231 = vld [vmem:[%s2 + $0x24] sm:$0xf]
  %v232 = vld [vmem:[%s2 + $0x28] sm:$0xf]
  %v233 = vld [vmem:[%s2 + $0x2c] sm:$0xf]
  %v234 = vld [vmem:[%s2 + $0x30] sm:$0xf]
  %v235 = vld [vmem:[%s2 + $0x34] sm:$0xf]
  %v236 = vld [vmem:[%s2 + $0x38] sm:$0xf]
  %v237 = vld [vmem:[%s2 + $0x3c] sm:$0xf]
  %v254 = vunpack.c.l.b16 %v222
  %v255 = vunpack.c.l.b16 %v223
  %v256 = vunpack.c.l.b16 %v224
  %v257 = vunpack.c.l.b16 %v225
  %v258 = vunpack.c.l.b16 %v226
  %v259 = vunpack.c.l.b16 %v227
  %v260 = vunpack.c.l.b16 %v228
  %v261 = vunpack.c.l.b16 %v229
  %v262 = vunpack.c.l.b16 %v230
  %v263 = vunpack.c.l.b16 %v231
  %v264 = vunpack.c.l.b16 %v232
  %v265 = vunpack.c.l.b16 %v233
  %v266 = vunpack.c.l.b16 %v234
  %v267 = vunpack.c.l.b16 %v235
  %v268 = vunpack.c.l.b16 %v236
  %v269 = vunpack.c.l.b16 %v237
  %v270 = vpack.c.b16 %v255, %v254
  %v271 = vpack.c.b16 %v257, %v256
  %v272 = vpack.c.b16 %v259, %v258
  %v273 = vpack.c.b16 %v261, %v260
  %v274 = vpack.c.b16 %v263, %v262
  %v275 = vpack.c.b16 %v265, %v264
  %v276 = vpack.c.b16 %v267, %v266
  %v277 = vpack.c.b16 %v269, %v268
  %286 = vmatpush.bf16.msra.mxu0 %v277
  %287 = vmatpush.bf16.msra.mxu0 %v276
  %288 = vmatpush.bf16.msra.mxu0 %v275
  %289 = vmatpush.bf16.msra.mxu0 %v274
  %290 = vmatpush.bf16.msra.mxu0 %v273
  %291 = vmatpush.bf16.msra.mxu0 %v272
  %292 = vmatpush.bf16.msra.mxu0 %v271
  %293 = vmatpush.bf16.msra.mxu0 %v270
  %294 = vmatmul.bf16.gmra.mxu0 %v214
  %v295 = vpop.f32.mrf.mxu0
  %v296 = vadd.f32 0.0, %v295
  %v297 = vpop.f32.mrf.mxu0
  %v298 = vadd.f32 0.0, %v297
  %299 = vmatmul.bf16.gmra.mxu0 %v215
  %v300 = vpop.f32.mrf.mxu0
  %v301 = vadd.f32 0.0, %v300
  %v302 = vpop.f32.mrf.mxu0
  %v303 = vadd.f32 0.0, %v302
  %304 = vmatmul.bf16.gmra.mxu0 %v216
  %v305 = vpop.f32.mrf.mxu0
  %v306 = vadd.f32 0.0, %v305
  %v307 = vpop.f32.mrf.mxu0
  %v308 = vadd.f32 0.0, %v307
  %309 = vmatmul.bf16.gmra.mxu0 %v217
  %v310 = vpop.f32.mrf.mxu0
  %v311 = vadd.f32 0.0, %v310
  %v312 = vpop.f32.mrf.mxu0
  %v313 = vadd.f32 0.0, %v312
  %314 = vmatmul.bf16.gmra.mxu0 %v218
  %v315 = vpop.f32.mrf.mxu0
  %v316 = vadd.f32 0.0, %v315
  %v317 = vpop.f32.mrf.mxu0
  %v318 = vadd.f32 0.0, %v317
  %319 = vmatmul.bf16.gmra.mxu0 %v219
  %v320 = vpop.f32.mrf.mxu0
  %v321 = vadd.f32 0.0, %v320
  %v322 = vpop.f32.mrf.mxu0
  %v323 = vadd.f32 0.0, %v322
  %324 = vmatmul.bf16.gmra.mxu0 %v220
  %v325 = vpop.f32.mrf.mxu0
  %v326 = vadd.f32 0.0, %v325
  %v327 = vpop.f32.mrf.mxu0
  %v328 = vadd.f32 0.0, %v327
  %329 = vmatmul.bf16.gmra.mxu0 %v221
  %v330 = vpop.f32.mrf.mxu0
  %v331 = vadd.f32 0.0, %v330
  %v332 = vpop.f32.mrf.mxu0
  %v333 = vadd.f32 0.0, %v332
  %334 = vdwg.mxu0
  %v335 = vpack.c.bf16 %v296, %v296
  %v336 = vpack.c.bf16 %v298, %v298
  %v337 = vpack.c.bf16 %v301, %v301
  %v338 = vpack.c.bf16 %v303, %v303
  %v339 = vpack.c.bf16 %v306, %v306
  %v340 = vpack.c.bf16 %v308, %v308
  %v341 = vpack.c.bf16 %v311, %v311
  %v342 = vpack.c.bf16 %v313, %v313
  %v343 = vpack.c.bf16 %v316, %v316
  %v344 = vpack.c.bf16 %v318, %v318
  %v345 = vpack.c.bf16 %v321, %v321
  %v346 = vpack.c.bf16 %v323, %v323
  %v347 = vpack.c.bf16 %v326, %v326
  %v348 = vpack.c.bf16 %v328, %v328
  %v349 = vpack.c.bf16 %v331, %v331
  %v350 = vpack.c.bf16 %v333, %v333
  %351 = vst [vmem:[%s4] sm:$0xf] %v335
  %352 = vst [vmem:[%s4 + $0x4] sm:$0xf] %v336
  %353 = vst [vmem:[%s4 + $0x8] sm:$0xf] %v337
  %354 = vst [vmem:[%s4 + $0xc] sm:$0xf] %v338
  %355 = vst [vmem:[%s4 + $0x10] sm:$0xf] %v339
  %356 = vst [vmem:[%s4 + $0x14] sm:$0xf] %v340
  %357 = vst [vmem:[%s4 + $0x18] sm:$0xf] %v341
  %358 = vst [vmem:[%s4 + $0x1c] sm:$0xf] %v342
  %359 = vst [vmem:[%s4 + $0x20] sm:$0xf] %v343
  %360 = vst [vmem:[%s4 + $0x24] sm:$0xf] %v344
  %361 = vst [vmem:[%s4 + $0x28] sm:$0xf] %v345
  %362 = vst [vmem:[%s4 + $0x2c] sm:$0xf] %v346
  %363 = vst [vmem:[%s4 + $0x30] sm:$0xf] %v347
  %364 = vst [vmem:[%s4 + $0x34] sm:$0xf] %v348
  %365 = vst [vmem:[%s4 + $0x38] sm:$0xf] %v349
  %366 = vst [vmem:[%s4 + $0x3c] sm:$0xf] %v350
  // Predicated region
  $region18: #{gcn_forward_padded.2} parent=0 // pred_check
    _
  $region19: #{gcn_forward_padded.2} parent=0 // pred_check_branch
    %368 = sbr.rel (0) target = $region21
  $region20: #{gcn_forward_padded.2} parent=0 // pred_region
    _
  $region21: #{gcn_forward_padded.2} parent=0 // pred_fallthru
    _
  // Predicated region
  $region22: #{gcn_forward_padded.2} parent=0 // pred_check
    _
  $region23: #{gcn_forward_padded.2} parent=0 // pred_check_branch
    %370 = sbr.rel (0) target = $region25
  $region24: #{gcn_forward_padded.2} parent=0 // pred_region
    _
  $region25: #{gcn_forward_padded.2} parent=0 // pred_fallthru
    _

</llo_original>
